<compile_context>
chip_gen: v5e
topology: v5e:2x2
jax: 0.10.0
libtpu: 0.0.40
codegen_flags: <defaults>
</compile_context>

<pallas_src>
import functools

import jax
import jax.numpy as jnp
from jax.experimental import pallas as pl
from jax.experimental.pallas import tpu as pltpu

_LANE_PARTICLES = 128          # particles packed along the lane axis
_PACKED_COLS = 4 * _LANE_PARTICLES  # 512 lanes per packed row


def _tp_kernel(p_ref, sel_ref, o_ref):
    # p_ref:   [TILE_ROWS, 512] packed momenta block in VMEM
    # sel_ref: [512, 128] constant selection/coefficient matrix in VMEM
    # o_ref:   [TILE_ROWS, 128] lane-dense kinetic-energy block
    e = p_ref[...].astype(jnp.float32)
    e = e * e                                           # VPU: one vmul per vreg
    # Collapse each group of 4 adjacent lanes (one particle) with the mass
    # coefficients folded in, using the otherwise-idle MXU.
    o_ref[...] = jnp.dot(
        e, sel_ref[...], preferred_element_type=jnp.float32
    ).astype(o_ref.dtype)


def _tp_reference(p, m_i, m_j):
    p_i_x, p_i_y, p_j_x, p_j_y = p[:, 0], p[:, 1], p[:, 2], p[:, 3]
    tp_i = p_i_x ** 2 / 2 * m_i + p_i_y ** 2 / 2 * m_i
    tp_j = p_j_x ** 2 / 2 * m_j + p_j_y ** 2 / 2 * m_j
    return tp_i + tp_j


def _make_selection_matrix(m_i, m_j):
    # sel[a, b] = coef[a] if a // 4 == b else 0, with
    # coef = (m_i/2, m_i/2, m_j/2, m_j/2) repeated along the 512 lanes.
    lane = jnp.arange(_PACKED_COLS)                     # [512]
    col = jnp.arange(_LANE_PARTICLES)                   # [128]
    coef = jnp.where((lane % 4) < 2, m_i / 2.0, m_j / 2.0).astype(jnp.float32)
    sel = jnp.where((lane[:, None] // 4) == col[None, :],
                    coef[:, None], jnp.float32(0.0))
    return sel.astype(jnp.float32)                      # [512, 128]


@functools.partial(jax.jit, static_argnames=("tile_rows",))
def _tp_forward_kernel(p, sel, *, tile_rows):
    n = p.shape[0]

    rows = pl.cdiv(n, _LANE_PARTICLES)
    rows8 = pl.cdiv(rows, 8) * 8                        # (8,128) tiling rule
    tr = min(tile_rows, rows8)                          # clamp tile to problem
    rows_pad = pl.cdiv(rows8, tr) * tr
    n_pad = rows_pad * _LANE_PARTICLES

    if n_pad != n:
        p = jnp.pad(p, ((0, n_pad - n), (0, 0)))        # zero rows -> zero energy

    p_packed = p.reshape(rows_pad, _PACKED_COLS)        # free reshape (contiguous)
    grid = (rows_pad // tr,)

    cost = pl.CostEstimate(
        flops=rows_pad * _PACKED_COLS * (1 + 2 * _LANE_PARTICLES),
        transcendentals=0,
        bytes_accessed=(p_packed.size + sel.size
                        + rows_pad * _LANE_PARTICLES) * 4,
    )

    out = pl.pallas_call(
        _tp_kernel,
        out_shape=jax.ShapeDtypeStruct((rows_pad, _LANE_PARTICLES), p.dtype),
        grid=grid,
        in_specs=[
            pl.BlockSpec((tr, _PACKED_COLS), lambda i: (i, 0)),
            pl.BlockSpec((_PACKED_COLS, _LANE_PARTICLES), lambda i: (0, 0)),
        ],
        out_specs=pl.BlockSpec((tr, _LANE_PARTICLES), lambda i: (i, 0)),
        compiler_params=pltpu.CompilerParams(
            dimension_semantics=("parallel",)),
        cost_estimate=cost,
    )(p_packed, sel)

    return out.reshape(n_pad)[:n]


def tp_forward(p, m_i, m_j, *, tile_rows=1024):
    """Pallas equivalent of Tp(m_i, m_j).forward(p). p: [N, 4] -> [N]."""
    n = p.shape[0]
    assert p.shape[1] == 4, "expected momenta with 4 components per row"

    if n < _LANE_PARTICLES:
        # Tiny problem: kernel launch/padding overhead dwarfs the work.
        return _tp_reference(p, float(m_i), float(m_j))

    sel = _make_selection_matrix(float(m_i), float(m_j))
    return _tp_forward_kernel(p, sel, tile_rows=int(tile_rows))


if __name__ == "__main__":
    key = jax.random.PRNGKey(0)
    m_i, m_j = 1.5, 2.5

    ok = True

    # 1) Kernel path, multiple grid steps (N = 4096 -> 32 packed rows, tile 8).
    k1, k2, k3 = jax.random.split(key, 3)
    p1 = jax.random.normal(k1, (4096, 4), dtype=jnp.float32)
    out1 = jax.block_until_ready(tp_forward(p1, m_i, m_j, tile_rows=8))
    ref1 = _tp_reference(p1, m_i, m_j)
    ok &= out1.shape == (4096,)
    ok &= bool(jnp.allclose(out1, ref1, atol=1e-4, rtol=1e-5))

    # 2) Kernel path with padding (N not a multiple of 128).
    p2 = jax.random.normal(k2, (1000, 4), dtype=jnp.float32)
    out2 = jax.block_until_ready(tp_forward(p2, m_i, m_j))
    ref2 = _tp_reference(p2, m_i, m_j)
    ok &= out2.shape == (1000,)
    ok &= bool(jnp.allclose(out2, ref2, atol=1e-4, rtol=1e-5))

    # 3) Tiny-N fallback path.
    p3 = jax.random.normal(k3, (8, 4), dtype=jnp.float32)
    out3 = jax.block_until_ready(tp_forward(p3, m_i, m_j))
    ref3 = _tp_reference(p3, m_i, m_j)
    ok &= out3.shape == (8,)
    ok &= bool(jnp.allclose(out3, ref3, atol=1e-5, rtol=1e-5))

    assert ok, "Pallas Tp kernel mismatch vs reference"
    print("KERNEL_OK")
</pallas_src>

<mosaic_0001>
module attributes {stable_mosaic.version = 11 : i64} {
  func.func @_tp_kernel(%arg0: i32, %arg1: memref<8x512xf32, #tpu.memory_space<vmem>>, %arg2: memref<512x128xf32, #tpu.memory_space<vmem>>, %arg3: memref<8x128xf32, #tpu.memory_space<vmem>>) attributes {dimension_semantics = [#tpu.dimension_semantics<parallel>], iteration_bounds = array<i64: 4>, scalar_prefetch = 0 : i64, scratch_operands = 0 : i64, tpu.core_type = #tpu.core_type<tc>, window_params = [{transform_indices = @transform_0, window_bounds = array<i64: 8, 512>}, {pipeline_mode = #tpu.pipeline_mode<synchronous>, transform_indices = @transform_1, window_bounds = array<i64: 512, 128>}, {transform_indices = @transform_2, window_bounds = array<i64: 8, 128>}]} {
    %c0 = arith.constant 0 : index
    %c0_0 = arith.constant 0 : index
    %0 = vector.load %arg1[%c0, %c0_0] : memref<8x512xf32, #tpu.memory_space<vmem>>, vector<8x512xf32>
    %1 = arith.mulf %0, %0 : vector<8x512xf32>
    %c0_1 = arith.constant 0 : index
    %c0_2 = arith.constant 0 : index
    %2 = vector.load %arg2[%c0_1, %c0_2] : memref<512x128xf32, #tpu.memory_space<vmem>>, vector<512x128xf32>
    %cst = arith.constant dense<0.000000e+00> : vector<8x128xf32>
    %3 = tpu.matmul %1, %2, %cst {dimension_numbers = #tpu.dot_dimension_numbers<[1], [0], [0], [1], [0, 0, 1, 1], [], []>} : vector<8x512xf32>, vector<512x128xf32>, vector<8x128xf32> -> vector<8x128xf32>
    %c0_3 = arith.constant 0 : index
    %c0_4 = arith.constant 0 : index
    %4 = vector.load %arg3[%c0_3, %c0_4] : memref<8x128xf32, #tpu.memory_space<vmem>>, vector<8x128xf32>
    tpu.vector_store %arg3[%c0_3, %c0_4], %3 {strides = array<i32>} : memref<8x128xf32, #tpu.memory_space<vmem>>, vector<8x128xf32>,
    return
  }
  func.func @transform_0(%arg0: i32) -> (i32, i32) {
    %c0_i32 = arith.constant 0 : i32
    %c0_i32_0 = arith.constant 0 : i32
    return %arg0, %c0_i32 : i32, i32
  }
  func.func @transform_1(%arg0: i32) -> (i32, i32) {
    %c0_i32 = arith.constant 0 : i32
    %c0_i32_0 = arith.constant 0 : i32
    %c0_i32_1 = arith.constant 0 : i32
    return %c0_i32, %c0_i32_0 : i32, i32
  }
  func.func @transform_2(%arg0: i32) -> (i32, i32) {
    %c0_i32 = arith.constant 0 : i32
    %c0_i32_0 = arith.constant 0 : i32
    return %arg0, %c0_i32 : i32, i32
  }
}

</mosaic_0001>

<llo_original>
// kernel: _tp_forward_kernel.1
$region0: #{_tp_forward_kernel.1}
  #allocation0 [shape = 'u32[]', space=smem, size = 0x4, offset = 0x4, fixed_abs, tag = 'smem constant byte address 0x4 - core index']
  #allocation1 [shape = 'u32[72,128]{1,0:T(1,128)}', space=vmem, size = 0x9000, scoped, tag = 'internal scratch']
  %s0 = inlined_call_operand.vmem [shape: f32[32,512], index: 0, kind: input, shape index: {}]
  %s1 = inlined_call_operand.vmem [shape: f32[512,128], index: 1, kind: input, shape index: {}]
  %s2 = inlined_call_operand.hbm [shape: f32[32,128], index: 2, kind: output, shape index: {}]
  %s3 = sld [smem:[#allocation0]]
  $region41: #{_tp_forward_kernel.1} parent=0
    _
  %s5 = ssub.s32 1, %s3
  %s6 = scalar_select 0, %s5, %s3
  $region1: #{_tp_forward_kernel.1} parent=0
    #allocation2 [shape = 'u8[8192]{0}', space=vmem, size = 0x2000, scoped, tag = 'output window, operand 0']
    #allocation3 [shape = 's32[2]{0}', space=sflag, size = 0x8, scoped, tag = 'scoped memory for _tp_forward_kernel.1']
    %7 = vsyncpa [#allocation3], 0
    %s8 = scalar_lea.sflag [#allocation3], 1
    %9 = vsyncpa %s8, 0
    loop: start=0, step=1, limit=6
    $region2: #{_tp_forward_kernel.1} parent=1 // loop_pre_header
      _
    $region3: #{_tp_forward_kernel.1} parent=1 // loop_header
      %s11 = sphi 0, %s15
      %p12 = scmp.ge.s32.totalorder %s11, 6
      %s21 = sphi 0, %s23
      %s24 = sphi 0, %s21
      %s25 = sphi 0, %s24
      %s41 = sphi 0, %s25
      %s45 = sphi 0, %s45
      %s47 = sphi 0, %s45
      %s48 = sphi 0, %s47
      %s62 = sphi 0, %s48
      %s68 = sphi 0, %s70
      %s71 = sphi 0, %s68
      %s72 = sphi 0, %s71
      %s88 = sphi 0, %s72
    $region4: #{_tp_forward_kernel.1} parent=1 // loop_header_branch
      %14 = sbr.rel (%p12) target = $region8
    $region5: #{_tp_forward_kernel.1} parent=1 // loop_body
      %s16 = ssub.s32 %s11, 1
      %s17 = ssub.s32 %s11, 2
      %s18 = sadd.s32 %s11, 1
      %s19 = ssub.s32 %s11, %s18
      %p20 = scmp.eq.s32.totalorder %s19, 0
      %s22 = sadd.s32 %s21, 1
      %s23 = scalar_select %p20, %s21, %s22
      %p26 = pneg %p20
      %p27 = scmp.eq.s32.totalorder %s11, 3
      %p28 = por %p26, %p27
      %p29 = scmp.ne.s32.totalorder %s21, %s24
      %p30 = scmp.eq.s32.totalorder %s11, 0
      %p31 = por %p29, %p30
      %p32 = scmp.ne.s32.totalorder %s21, %s24
      %p33 = scmp.eq.s32.totalorder %s16, 3
      %p34 = por %p32, %p33
      %p35 = scmp.ne.s32.totalorder %s24, %s25
      %p36 = scmp.eq.s32.totalorder %s16, 0
      %p37 = por %p35, %p36
      %p38 = scmp.ne.s32.totalorder %s24, %s25
      %p39 = scmp.eq.s32.totalorder %s17, 3
      %p40 = por %p38, %p39
      %p42 = scmp.ne.s32.totalorder %s25, %s41
      %p43 = scmp.eq.s32.totalorder %s17, 0
      %p44 = por %p42, %p43
      %s46 = sadd.s32 %s45, 1
      %p49 = scmp.eq.s32.totalorder %s11, 3
      %p50 = scmp.ne.s32.totalorder %s45, %s47
      %p51 = scmp.eq.s32.totalorder %s11, 0
      %p52 = por %p50, %p51
      %p53 = scmp.ne.s32.totalorder %s45, %s47
      %p54 = scmp.eq.s32.totalorder %s16, 3
      %p55 = por %p53, %p54
      %p56 = scmp.ne.s32.totalorder %s47, %s48
      %p57 = scmp.eq.s32.totalorder %s16, 0
      %p58 = por %p56, %p57
      %p59 = scmp.ne.s32.totalorder %s47, %s48
      %p60 = scmp.eq.s32.totalorder %s17, 3
      %p61 = por %p59, %p60
      %p63 = scmp.ne.s32.totalorder %s48, %s62
      %p64 = scmp.eq.s32.totalorder %s17, 0
      %p65 = por %p63, %p64
      %s66 = ssub.s32 %s11, %s18
      %p67 = scmp.eq.s32.totalorder %s66, 0
      %s69 = sadd.s32 %s68, 1
      %s70 = scalar_select %p67, %s68, %s69
      %p73 = pneg %p67
      %p74 = scmp.eq.s32.totalorder %s11, 3
      %p75 = por %p73, %p74
      %p76 = scmp.ne.s32.totalorder %s68, %s71
      %p77 = scmp.eq.s32.totalorder %s11, 0
      %p78 = por %p76, %p77
      %p79 = scmp.ne.s32.totalorder %s68, %s71
      %p80 = scmp.eq.s32.totalorder %s16, 3
      %p81 = por %p79, %p80
      %p82 = scmp.ne.s32.totalorder %s71, %s72
      %p83 = scmp.eq.s32.totalorder %s16, 0
      %p84 = por %p82, %p83
      %p85 = scmp.ne.s32.totalorder %s71, %s72
      %p86 = scmp.eq.s32.totalorder %s17, 3
      %p87 = por %p85, %p86
      %p89 = scmp.ne.s32.totalorder %s72, %s88
      %p90 = scmp.eq.s32.totalorder %s17, 0
      %p91 = por %p89, %p90
      %p92 = scmp.le.s32.totalorder 1, %s11
      %p93 = scmp.lt.s32.totalorder %s11, 5
      %p94 = pnand %p92, %p93
      %p95 = pneg %p94
      // Predicated region
      $region9: #{_tp_forward_kernel.1} parent=5 // pred_check
        _
      $region10: #{_tp_forward_kernel.1} parent=5 // pred_check_branch
        %97 = sbr.rel (%p94) target = $region12
      $region11: #{_tp_forward_kernel.1} parent=5 // pred_region
        %s98 = ssub.s32 %s11, 1
        // Predicated region
        $region13: #{_tp_forward_kernel.1} parent=11 // pred_check
          %p99 = pneg %p58
        $region14: #{_tp_forward_kernel.1} parent=11 // pred_check_branch
          %101 = sbr.rel (%p99) target = $region16
        $region15: #{_tp_forward_kernel.1} parent=11 // pred_region
          _
        $region16: #{_tp_forward_kernel.1} parent=11 // pred_fallthru
          _
      $region12: #{_tp_forward_kernel.1} parent=5 // pred_fallthru
        _
      %p102 = scmp.lt.s32.totalorder %s11, 4
      // Predicated region
      $region17: #{_tp_forward_kernel.1} parent=5 // pred_check
        %p103 = pneg %p102
      $region18: #{_tp_forward_kernel.1} parent=5 // pred_check_branch
        %105 = sbr.rel (%p103) target = $region20
      $region19: #{_tp_forward_kernel.1} parent=5 // pred_region
        // Predicated region
        $region21: #{_tp_forward_kernel.1} parent=19 // pred_check
          %p106 = pneg %p31
        $region22: #{_tp_forward_kernel.1} parent=19 // pred_check_branch
          %108 = sbr.rel (%p106) target = $region24
        $region23: #{_tp_forward_kernel.1} parent=19 // pred_region
          %p109 = scmp.lt.s32.totalorder %s11, 3
          %s110 = scalar_select %p109, %s11, 3
          %s111 = smul.addr %s110, 4
          %s112 = smul.addr %s111, 8
          %s113 = scalar_lea.vmem %s0, %s112
        $region24: #{_tp_forward_kernel.1} parent=19 // pred_fallthru
          _
      $region20: #{_tp_forward_kernel.1} parent=5 // pred_fallthru
        _
      %p114 = scmp.le.s32.totalorder 1, %s11
      %p115 = scmp.lt.s32.totalorder %s11, 5
      %p116 = pnand %p114, %p115
      %p117 = pneg %p116
      // Predicated region
      $region25: #{_tp_forward_kernel.1} parent=5 // pred_check
        _
      $region26: #{_tp_forward_kernel.1} parent=5 // pred_check_branch
        %119 = sbr.rel (%p116) target = $region28
      $region27: #{_tp_forward_kernel.1} parent=5 // pred_region
        %s120 = ssub.s32 %s11, 1
        %p121 = scmp.lt.s32.totalorder %s16, 3
        %s122 = scalar_select %p121, %s16, 3
        %s123 = smul.addr %s122, 4
        %s124 = smul.addr %s123, 8
        %s125 = scalar_lea.vmem %s0, %s124
        %p126 = pneg %p37
        %p127 = pneg %p34
        %p128 = pneg %p58
        %p129 = pneg %p55
        %p130 = pneg %p84
        %p131 = pneg %p81
        %s132 = sand.u32 %s71, 1
        %s133 = scalar_lea.sflag [#allocation3], %s132
        %s134 = sand.u32 %s71, 1
        %s135 = smul.addr %s134, 8
        %s136 = scalar_lea.vmem [#allocation2], %s135
        %p137 = scmp.lt.s32.totalorder %s16, 3
        %s138 = scalar_select %p137, %s16, 3
        %s139 = smul.addr %s138, 4
        %s140 = smul.addr %s139, 8
        %s141 = scalar_lea.vmem %s0, %s140
        %v142 = vld [vmem:[%s141] sm:$0xff]
        %v143 = vld [vmem:[%s141 + $0x8] sm:$0xff]
        %v144 = vld [vmem:[%s141 + $0x10] sm:$0xff]
        %v145 = vld [vmem:[%s141 + $0x18] sm:$0xff]
        %v146 = vmul.f32 %v142, %v142
        %v147 = vmul.f32 %v143, %v143
        %v148 = vmul.f32 %v144, %v144
        %v149 = vmul.f32 %v145, %v145
        %v150 = vld [vmem:[%s1] sm:$0xff]
        %v151 = vld [vmem:[%s1 + $0x8] sm:$0xff]
        %v152 = vld [vmem:[%s1 + $0x10] sm:$0xff]
        %v153 = vld [vmem:[%s1 + $0x18] sm:$0xff]
        %v154 = vld [vmem:[%s1 + $0x20] sm:$0xff]
        %v155 = vld [vmem:[%s1 + $0x28] sm:$0xff]
        %v156 = vld [vmem:[%s1 + $0x30] sm:$0xff]
        %v157 = vld [vmem:[%s1 + $0x38] sm:$0xff]
        %v158 = vld [vmem:[%s1 + $0x40] sm:$0xff]
        %v159 = vld [vmem:[%s1 + $0x48] sm:$0xff]
        %v160 = vld [vmem:[%s1 + $0x50] sm:$0xff]
        %v161 = vld [vmem:[%s1 + $0x58] sm:$0xff]
        %v162 = vld [vmem:[%s1 + $0x60] sm:$0xff]
        %v163 = vld [vmem:[%s1 + $0x68] sm:$0xff]
        %v164 = vld [vmem:[%s1 + $0x70] sm:$0xff]
        %v165 = vld [vmem:[%s1 + $0x78] sm:$0xff]
        %v166 = vld [vmem:[%s1 + $0x80] sm:$0xff]
        %v167 = vld [vmem:[%s1 + $0x88] sm:$0xff]
        %v168 = vld [vmem:[%s1 + $0x90] sm:$0xff]
        %v169 = vld [vmem:[%s1 + $0x98] sm:$0xff]
        %v170 = vld [vmem:[%s1 + $0xa0] sm:$0xff]
        %v171 = vld [vmem:[%s1 + $0xa8] sm:$0xff]
        %v172 = vld [vmem:[%s1 + $0xb0] sm:$0xff]
        %v173 = vld [vmem:[%s1 + $0xb8] sm:$0xff]
        %v174 = vld [vmem:[%s1 + $0xc0] sm:$0xff]
        %v175 = vld [vmem:[%s1 + $0xc8] sm:$0xff]
        %v176 = vld [vmem:[%s1 + $0xd0] sm:$0xff]
        %v177 = vld [vmem:[%s1 + $0xd8] sm:$0xff]
        %v178 = vld [vmem:[%s1 + $0xe0] sm:$0xff]
        %v179 = vld [vmem:[%s1 + $0xe8] sm:$0xff]
        %v180 = vld [vmem:[%s1 + $0xf0] sm:$0xff]
        %v181 = vld [vmem:[%s1 + $0xf8] sm:$0xff]
        %v182 = vld [vmem:[%s1 + $0x100] sm:$0xff]
        %v183 = vld [vmem:[%s1 + $0x108] sm:$0xff]
        %v184 = vld [vmem:[%s1 + $0x110] sm:$0xff]
        %v185 = vld [vmem:[%s1 + $0x118] sm:$0xff]
        %v186 = vld [vmem:[%s1 + $0x120] sm:$0xff]
        %v187 = vld [vmem:[%s1 + $0x128] sm:$0xff]
        %v188 = vld [vmem:[%s1 + $0x130] sm:$0xff]
        %v189 = vld [vmem:[%s1 + $0x138] sm:$0xff]
        %v190 = vld [vmem:[%s1 + $0x140] sm:$0xff]
        %v191 = vld [vmem:[%s1 + $0x148] sm:$0xff]
        %v192 = vld [vmem:[%s1 + $0x150] sm:$0xff]
        %v193 = vld [vmem:[%s1 + $0x158] sm:$0xff]
        %v194 = vld [vmem:[%s1 + $0x160] sm:$0xff]
        %v195 = vld [vmem:[%s1 + $0x168] sm:$0xff]
        %v196 = vld [vmem:[%s1 + $0x170] sm:$0xff]
        %v197 = vld [vmem:[%s1 + $0x178] sm:$0xff]
        %v198 = vld [vmem:[%s1 + $0x180] sm:$0xff]
        %v199 = vld [vmem:[%s1 + $0x188] sm:$0xff]
        %v200 = vld [vmem:[%s1 + $0x190] sm:$0xff]
        %v201 = vld [vmem:[%s1 + $0x198] sm:$0xff]
        %v202 = vld [vmem:[%s1 + $0x1a0] sm:$0xff]
        %v203 = vld [vmem:[%s1 + $0x1a8] sm:$0xff]
        %v204 = vld [vmem:[%s1 + $0x1b0] sm:$0xff]
        %v205 = vld [vmem:[%s1 + $0x1b8] sm:$0xff]
        %v206 = vld [vmem:[%s1 + $0x1c0] sm:$0xff]
        %v207 = vld [vmem:[%s1 + $0x1c8] sm:$0xff]
        %v208 = vld [vmem:[%s1 + $0x1d0] sm:$0xff]
        %v209 = vld [vmem:[%s1 + $0x1d8] sm:$0xff]
        %v210 = vld [vmem:[%s1 + $0x1e0] sm:$0xff]
        %v211 = vld [vmem:[%s1 + $0x1e8] sm:$0xff]
        %v212 = vld [vmem:[%s1 + $0x1f0] sm:$0xff]
        %v213 = vld [vmem:[%s1 + $0x1f8] sm:$0xff]
        %214 = vmatpush.msra.mxu0 %v165
        %215 = vmatpush.msra.mxu0 %v164
        %216 = vmatpush.msra.mxu0 %v163
        %217 = vmatpush.msra.mxu0 %v162
        %218 = vmatpush.msra.mxu0 %v161
        %219 = vmatpush.msra.mxu0 %v160
        %220 = vmatpush.msra.mxu0 %v159
        %221 = vmatpush.msra.mxu0 %v158
        %222 = vmatpush.msra.mxu0 %v157
        %223 = vmatpush.msra.mxu0 %v156
        %224 = vmatpush.msra.mxu0 %v155
        %225 = vmatpush.msra.mxu0 %v154
        %226 = vmatpush.msra.mxu0 %v153
        %227 = vmatpush.msra.mxu0 %v152
        %228 = vmatpush.msra.mxu0 %v151
        %229 = vmatpush.msra.mxu0 %v150
        %230 = vmatmul.f32.gmra.mxu0 %v146
        %v231 = vpop.f32.mrf.mxu0
        %v232 = vadd.f32 0.0, %v231
        %233 = vdwg.mxu0
        %234 = vmatpush.msra.mxu0 %v181
        %235 = vmatpush.msra.mxu0 %v180
        %236 = vmatpush.msra.mxu0 %v179
        %237 = vmatpush.msra.mxu0 %v178
        %238 = vmatpush.msra.mxu0 %v177
        %239 = vmatpush.msra.mxu0 %v176
        %240 = vmatpush.msra.mxu0 %v175
        %241 = vmatpush.msra.mxu0 %v174
        %242 = vmatpush.msra.mxu0 %v173
        %243 = vmatpush.msra.mxu0 %v172
        %244 = vmatpush.msra.mxu0 %v171
        %245 = vmatpush.msra.mxu0 %v170
        %246 = vmatpush.msra.mxu0 %v169
        %247 = vmatpush.msra.mxu0 %v168
        %248 = vmatpush.msra.mxu0 %v167
        %249 = vmatpush.msra.mxu0 %v166
        %250 = vmatmul.f32.gmra.mxu0 %v147
        %v251 = vpop.f32.mrf.mxu0
        %v252 = vadd.f32 %v232, %v251
        %253 = vdwg.mxu0
        %254 = vmatpush.msra.mxu0 %v197
        %255 = vmatpush.msra.mxu0 %v196
        %256 = vmatpush.msra.mxu0 %v195
        %257 = vmatpush.msra.mxu0 %v194
        %258 = vmatpush.msra.mxu0 %v193
        %259 = vmatpush.msra.mxu0 %v192
        %260 = vmatpush.msra.mxu0 %v191
        %261 = vmatpush.msra.mxu0 %v190
        %262 = vmatpush.msra.mxu0 %v189
        %263 = vmatpush.msra.mxu0 %v188
        %264 = vmatpush.msra.mxu0 %v187
        %265 = vmatpush.msra.mxu0 %v186
        %266 = vmatpush.msra.mxu0 %v185
        %267 = vmatpush.msra.mxu0 %v184
        %268 = vmatpush.msra.mxu0 %v183
        %269 = vmatpush.msra.mxu0 %v182
        %270 = vmatmul.f32.gmra.mxu0 %v148
        %v271 = vpop.f32.mrf.mxu0
        %v272 = vadd.f32 %v252, %v271
        %273 = vdwg.mxu0
        %274 = vmatpush.msra.mxu0 %v213
        %275 = vmatpush.msra.mxu0 %v212
        %276 = vmatpush.msra.mxu0 %v211
        %277 = vmatpush.msra.mxu0 %v210
        %278 = vmatpush.msra.mxu0 %v209
        %279 = vmatpush.msra.mxu0 %v208
        %280 = vmatpush.msra.mxu0 %v207
        %281 = vmatpush.msra.mxu0 %v206
        %282 = vmatpush.msra.mxu0 %v205
        %283 = vmatpush.msra.mxu0 %v204
        %284 = vmatpush.msra.mxu0 %v203
        %285 = vmatpush.msra.mxu0 %v202
        %286 = vmatpush.msra.mxu0 %v201
        %287 = vmatpush.msra.mxu0 %v200
        %288 = vmatpush.msra.mxu0 %v199
        %289 = vmatpush.msra.mxu0 %v198
        %290 = vmatmul.f32.gmra.mxu0 %v149
        %v291 = vpop.f32.mrf.mxu0
        %v292 = vadd.f32 %v272, %v291
        %293 = vdwg.mxu0
        %294 = vst [vmem:[%s136] sm:$0xff] %v292
        %s295 = sand.u32 %s71, 1
        %s296 = scalar_lea.sflag [#allocation3], %s295
        %s297 = sand.u32 %s71, 1
        %s298 = smul.addr %s297, 8
        %s299 = scalar_lea.vmem [#allocation2], %s298
        // Predicated region
        $region29: #{_tp_forward_kernel.1} parent=27 // pred_check
          %p300 = pneg %p81
        $region30: #{_tp_forward_kernel.1} parent=27 // pred_check_branch
          %302 = sbr.rel (%p300) target = $region32
        $region31: #{_tp_forward_kernel.1} parent=27 // pred_region
          %304 = vsyncadd %s296, 0
          %s305 = smul.addr %s16, 8
          %s306 = scalar_lea.hbm %s2, %s305
          %s308 = sshll.u32 %s299, 4
          %s309 = int_to_ptr.vmem [resolvable:$true] %s308
          %s310 = sshll.u32 %s306, 4
          %s311 = int_to_ptr.hbm [resolvable:$true] %s310
          %313 = dma.vmem_to_hbm [thread:$0]  %s309, 128, %s311, %s296
        $region32: #{_tp_forward_kernel.1} parent=27 // pred_fallthru
          _
      $region28: #{_tp_forward_kernel.1} parent=5 // pred_fallthru
        _
      %p314 = scmp.le.s32.totalorder 2, %s11
      // Predicated region
      $region33: #{_tp_forward_kernel.1} parent=5 // pred_check
        %p315 = pneg %p314
      $region34: #{_tp_forward_kernel.1} parent=5 // pred_check_branch
        %317 = sbr.rel (%p315) target = $region36
      $region35: #{_tp_forward_kernel.1} parent=5 // pred_region
        %s318 = ssub.s32 %s11, 2
        // Predicated region
        $region37: #{_tp_forward_kernel.1} parent=35 // pred_check
          %p319 = pneg %p87
        $region38: #{_tp_forward_kernel.1} parent=35 // pred_check_branch
          %321 = sbr.rel (%p319) target = $region40
        $region39: #{_tp_forward_kernel.1} parent=35 // pred_region
          %s322 = sand.u32 %s72, 1
          %s323 = scalar_lea.sflag [#allocation3], %s322
          %s324 = sand.u32 %s72, 1
          %s325 = smul.addr %s324, 8
          %s326 = scalar_lea.vmem [#allocation2], %s325
          %328 = dma.done %s323, 128
        $region40: #{_tp_forward_kernel.1} parent=35 // pred_fallthru
          _
      $region36: #{_tp_forward_kernel.1} parent=5 // pred_fallthru
        _
    $region6: #{_tp_forward_kernel.1} parent=1 // loop_footer
      %s15 = sadd.s32 1, %s11
    $region7: #{_tp_forward_kernel.1} parent=1 // loop_footer_branch
      %10 = sbr.rel target = $region3
    $region8: #{_tp_forward_kernel.1} parent=1 // loop_exit
      _
    %329 = vsyncpa [#allocation3], 1
    %s330 = scalar_lea.sflag [#allocation3], 1
    %331 = vsyncpa %s330, 1

</llo_original>
